<compile_context>
chip_gen: v7x
topology: tpu7x:2x2x1
jax: 0.10.0
libtpu: 0.0.40
codegen_flags: <defaults>
</compile_context>

<pallas_src>
import functools

import numpy as np
import jax
import jax.numpy as jnp
from jax.experimental import pallas as pl
from jax.experimental.pallas import tpu as pltpu

P_DROP = 0.1
SCALE = 1.0 / (1.0 - P_DROP)
# Drop an element when its uniform uint32 draw is below this threshold.
# round(0.1 * 2**32) = 429496730 -> p accurate to ~2e-10.
THRESH = np.uint32(int(round(P_DROP * (2 ** 32))))


def _dropout_prng_kernel(seed_ref, x_ref, o_ref):
    """TPU path: hardware PRNG inside the kernel (one DMA read + one write)."""
    # Salt the seed per grid step so every block / TensorCore gets an
    # independent random stream (reseed cost: a couple of scalar ops).
    pltpu.prng_seed(seed_ref[0] + pl.program_id(0))

    bits = pltpu.prng_random_bits(x_ref.shape)   # raw 32-bit randoms
    if bits.dtype != jnp.uint32:                 # trace-time check, no runtime cost
        bits = pltpu.bitcast(bits, jnp.uint32)
    keep = bits >= THRESH                        # unsigned compare: P(keep) = 1 - p

    # Weak-typed Python scalars -> no upcast; output stays in input dtype.
    o_ref[...] = jnp.where(keep, x_ref[...] * SCALE, 0.0)


def _dropout_mask_kernel(x_ref, bits_ref, o_ref):
    """Portable fallback path: random bits precomputed outside the kernel."""
    keep = bits_ref[...] >= THRESH
    o_ref[...] = jnp.where(keep, x_ref[...] * SCALE, 0.0)


@functools.partial(jax.jit, static_argnames=("training",))
def dropout_pallas(x, seed, training=True):
    """x: (B, S, H) float32. seed: int32 scalar. Returns same shape/dtype."""
    if not training:
        return x

    B, S, H = x.shape
    rows = B * S                                  # 384
    x2 = x.reshape(rows, H)                       # (384, 768): lane dim % 128 == 0

    # Pick the largest block count in {4, 2, 1} keeping rows_per_block % 8 == 0.
    n_blocks = next(n for n in (4, 2, 1) if rows % (8 * n) == 0)
    block_rows = rows // n_blocks                 # 96 rows per block

    cost = pl.CostEstimate(
        flops=2 * rows * H,
        transcendentals=0,
        bytes_accessed=2 * rows * H * x.dtype.itemsize,
    )

    if jax.default_backend() == "tpu":
        seed_arr = jnp.asarray(seed, dtype=jnp.int32).reshape((1,))
        out2 = pl.pallas_call(
            _dropout_prng_kernel,
            out_shape=jax.ShapeDtypeStruct((rows, H), x.dtype),
            grid_spec=pltpu.PrefetchScalarGridSpec(
                num_scalar_prefetch=1,
                grid=(n_blocks,),
                in_specs=[pl.BlockSpec((block_rows, H), lambda i, seed: (i, 0))],
                out_specs=pl.BlockSpec((block_rows, H), lambda i, seed: (i, 0)),
            ),
            compiler_params=pltpu.CompilerParams(
                dimension_semantics=("parallel",),
            ),
            cost_estimate=cost,
        )(seed_arr, x2)
    else:
        # CPU / interpret fallback: draw the random bits with jax.random so no
        # TPU-only primitive is lowered; the Pallas kernel only does
        # compare + scale + select.
        key = jax.random.PRNGKey(seed)
        bits = jax.random.bits(key, (rows, H), dtype=jnp.uint32)
        out2 = pl.pallas_call(
            _dropout_mask_kernel,
            out_shape=jax.ShapeDtypeStruct((rows, H), x.dtype),
            grid=(n_blocks,),
            in_specs=[
                pl.BlockSpec((block_rows, H), lambda i: (i, 0)),
                pl.BlockSpec((block_rows, H), lambda i: (i, 0)),
            ],
            out_specs=pl.BlockSpec((block_rows, H), lambda i: (i, 0)),
            cost_estimate=cost,
        )(x2, bits)

    return out2.reshape(B, S, H)


if __name__ == "__main__":
    key = jax.random.PRNGKey(0)
    # Shape matches the PyTorch module's input: torch.Size([1, 384, 768])
    x439 = jax.random.normal(key, (1, 384, 768), dtype=jnp.float32)

    out = dropout_pallas(x439, seed=jnp.int32(0), training=True)
    out = jax.block_until_ready(out)

    # Sanity checks on dropout semantics.
    assert out.shape == x439.shape and out.dtype == x439.dtype
    zero_frac = float(jnp.mean(out == 0.0))
    kept = out != 0.0
    max_err = float(jnp.max(jnp.abs(jnp.where(kept, out - x439 * SCALE, 0.0))))
    assert 0.02 < zero_frac < 0.25, f"unexpected drop fraction {zero_frac}"
    assert max_err < 1e-5, f"survivor scaling mismatch {max_err}"

    # eval-mode path is the identity
    out_eval = jax.block_until_ready(
        dropout_pallas(x439, seed=jnp.int32(0), training=False)
    )
    assert bool(jnp.all(out_eval == x439))

    print("KERNEL_OK")
</pallas_src>

<mosaic_0001>
module attributes {stable_mosaic.version = 11 : i64} {
  func.func @_dropout_mask_kernel(%arg0: i32, %arg1: memref<96x768xf32, #tpu.memory_space<vmem>>, %arg2: memref<96x768xi32, #tpu.memory_space<vmem>>, %arg3: memref<96x768xf32, #tpu.memory_space<vmem>>) attributes {dimension_semantics = [#tpu.dimension_semantics<arbitrary>], iteration_bounds = array<i64: 4>, scalar_prefetch = 0 : i64, scratch_operands = 0 : i64, tpu.core_type = #tpu.core_type<tc>, window_params = [{transform_indices = @transform_0, window_bounds = array<i64: 96, 768>}, {transform_indices = @transform_1, window_bounds = array<i64: 96, 768>}, {transform_indices = @transform_2, window_bounds = array<i64: 96, 768>}]} {
    %c0 = arith.constant 0 : index
    %c0_0 = arith.constant 0 : index
    %0 = vector.load %arg2[%c0, %c0_0] : memref<96x768xi32, #tpu.memory_space<vmem>>, vector<96x768xi32>
    %c429496730_i32 = arith.constant 429496730 : i32
    %1 = vector.broadcast %c429496730_i32 : i32 to vector<96x768xi32>
    %2 = arith.cmpi uge, %0, %1 : vector<96x768xi32>
    %c0_1 = arith.constant 0 : index
    %c0_2 = arith.constant 0 : index
    %3 = vector.load %arg1[%c0_1, %c0_2] : memref<96x768xf32, #tpu.memory_space<vmem>>, vector<96x768xf32>
    %cst = arith.constant 1.11111116 : f32
    %4 = vector.broadcast %cst : f32 to vector<96x768xf32>
    %5 = arith.mulf %3, %4 : vector<96x768xf32>
    %cst_3 = arith.constant 0.000000e+00 : f32
    %6 = vector.broadcast %cst_3 : f32 to vector<96x768xf32>
    %7 = arith.select %2, %5, %6 : vector<96x768xi1>, vector<96x768xf32>
    %c0_4 = arith.constant 0 : index
    %c0_5 = arith.constant 0 : index
    %8 = vector.load %arg3[%c0_4, %c0_5] : memref<96x768xf32, #tpu.memory_space<vmem>>, vector<96x768xf32>
    tpu.vector_store %arg3[%c0_4, %c0_5], %7 {strides = array<i32>} : memref<96x768xf32, #tpu.memory_space<vmem>>, vector<96x768xf32>,
    return
  }
  func.func @transform_0(%arg0: i32) -> (i32, i32) {
    %c0_i32 = arith.constant 0 : i32
    %c0_i32_0 = arith.constant 0 : i32
    return %arg0, %c0_i32 : i32, i32
  }
  func.func @transform_1(%arg0: i32) -> (i32, i32) {
    %c0_i32 = arith.constant 0 : i32
    %c0_i32_0 = arith.constant 0 : i32
    return %arg0, %c0_i32 : i32, i32
  }
  func.func @transform_2(%arg0: i32) -> (i32, i32) {
    %c0_i32 = arith.constant 0 : i32
    %c0_i32_0 = arith.constant 0 : i32
    return %arg0, %c0_i32 : i32, i32
  }
}

</mosaic_0001>

<llo_original>
// kernel: dropout_pallas.1
$region0: #{dropout_pallas.1}
  #allocation0 [shape = 'u32[]', space=smem, size = 0x4, offset = 0x4, fixed_abs, tag = 'smem constant byte address 0x4 - core index']
  #allocation1 [shape = 'u32[144,128]{1,0:T(1,128)}', space=vmem, size = 0x12000, scoped, tag = 'internal scratch']
  %s0 = inlined_call_operand.vmem [shape: f32[384,768], index: 0, kind: input, shape index: {}]
  %s1 = inlined_call_operand.vmem [shape: u32[384,768], index: 1, kind: input, shape index: {}]
  %s2 = inlined_call_operand.hbm [shape: f32[384,768], index: 2, kind: output, shape index: {}]
  %s3 = sld [smem:[#allocation0]]
  $region41: #{dropout_pallas.1} parent=0
    _
  %s5 = ssub.s32 1, %s3
  %s6 = scalar_select 0, %s5, %s3
  $region1: #{dropout_pallas.1} parent=0
    #allocation2 [shape = 'u8[589824]{0}', space=vmem, size = 0x90000, scoped, tag = 'output window, operand 0']
    #allocation3 [shape = 's32[2]{0}', space=sflag, size = 0x8, scoped, tag = 'scoped memory for dropout_pallas.1']
    %7 = vsyncpa [#allocation3], 0
    %s8 = scalar_lea.sflag [#allocation3], 1
    %9 = vsyncpa %s8, 0
    loop: start=0, step=1, limit=6
    $region2: #{dropout_pallas.1} parent=1 // loop_pre_header
      _
    $region3: #{dropout_pallas.1} parent=1 // loop_header
      %s11 = sphi 0, %s15
      %p12 = scmp.ge.s32.totalorder %s11, 6
      %s21 = sphi 0, %s23
      %s24 = sphi 0, %s21
      %s25 = sphi 0, %s24
      %s41 = sphi 0, %s25
      %s47 = sphi 0, %s49
      %s50 = sphi 0, %s47
      %s51 = sphi 0, %s50
      %s67 = sphi 0, %s51
      %s73 = sphi 0, %s75
      %s76 = sphi 0, %s73
      %s77 = sphi 0, %s76
      %s93 = sphi 0, %s77
    $region4: #{dropout_pallas.1} parent=1 // loop_header_branch
      %14 = sbr.rel (%p12) target = $region8
    $region5: #{dropout_pallas.1} parent=1 // loop_body
      %s16 = ssub.s32 %s11, 1
      %s17 = ssub.s32 %s11, 2
      %s18 = sadd.s32 %s11, 1
      %s19 = ssub.s32 %s11, %s18
      %p20 = scmp.eq.s32.totalorder %s19, 0
      %s22 = sadd.s32 %s21, 1
      %s23 = scalar_select %p20, %s21, %s22
      %p26 = pneg %p20
      %p27 = scmp.eq.s32.totalorder %s11, 3
      %p28 = por %p26, %p27
      %p29 = scmp.ne.s32.totalorder %s21, %s24
      %p30 = scmp.eq.s32.totalorder %s11, 0
      %p31 = por %p29, %p30
      %p32 = scmp.ne.s32.totalorder %s21, %s24
      %p33 = scmp.eq.s32.totalorder %s16, 3
      %p34 = por %p32, %p33
      %p35 = scmp.ne.s32.totalorder %s24, %s25
      %p36 = scmp.eq.s32.totalorder %s16, 0
      %p37 = por %p35, %p36
      %p38 = scmp.ne.s32.totalorder %s24, %s25
      %p39 = scmp.eq.s32.totalorder %s17, 3
      %p40 = por %p38, %p39
      %p42 = scmp.ne.s32.totalorder %s25, %s41
      %p43 = scmp.eq.s32.totalorder %s17, 0
      %p44 = por %p42, %p43
      %s45 = ssub.s32 %s11, %s18
      %p46 = scmp.eq.s32.totalorder %s45, 0
      %s48 = sadd.s32 %s47, 1
      %s49 = scalar_select %p46, %s47, %s48
      %p52 = pneg %p46
      %p53 = scmp.eq.s32.totalorder %s11, 3
      %p54 = por %p52, %p53
      %p55 = scmp.ne.s32.totalorder %s47, %s50
      %p56 = scmp.eq.s32.totalorder %s11, 0
      %p57 = por %p55, %p56
      %p58 = scmp.ne.s32.totalorder %s47, %s50
      %p59 = scmp.eq.s32.totalorder %s16, 3
      %p60 = por %p58, %p59
      %p61 = scmp.ne.s32.totalorder %s50, %s51
      %p62 = scmp.eq.s32.totalorder %s16, 0
      %p63 = por %p61, %p62
      %p64 = scmp.ne.s32.totalorder %s50, %s51
      %p65 = scmp.eq.s32.totalorder %s17, 3
      %p66 = por %p64, %p65
      %p68 = scmp.ne.s32.totalorder %s51, %s67
      %p69 = scmp.eq.s32.totalorder %s17, 0
      %p70 = por %p68, %p69
      %s71 = ssub.s32 %s11, %s18
      %p72 = scmp.eq.s32.totalorder %s71, 0
      %s74 = sadd.s32 %s73, 1
      %s75 = scalar_select %p72, %s73, %s74
      %p78 = pneg %p72
      %p79 = scmp.eq.s32.totalorder %s11, 3
      %p80 = por %p78, %p79
      %p81 = scmp.ne.s32.totalorder %s73, %s76
      %p82 = scmp.eq.s32.totalorder %s11, 0
      %p83 = por %p81, %p82
      %p84 = scmp.ne.s32.totalorder %s73, %s76
      %p85 = scmp.eq.s32.totalorder %s16, 3
      %p86 = por %p84, %p85
      %p87 = scmp.ne.s32.totalorder %s76, %s77
      %p88 = scmp.eq.s32.totalorder %s16, 0
      %p89 = por %p87, %p88
      %p90 = scmp.ne.s32.totalorder %s76, %s77
      %p91 = scmp.eq.s32.totalorder %s17, 3
      %p92 = por %p90, %p91
      %p94 = scmp.ne.s32.totalorder %s77, %s93
      %p95 = scmp.eq.s32.totalorder %s17, 0
      %p96 = por %p94, %p95
      %p97 = scmp.le.s32.totalorder 1, %s11
      %p98 = scmp.lt.s32.totalorder %s11, 5
      %p99 = pnand %p97, %p98
      %p100 = pneg %p99
      // Predicated region
      $region9: #{dropout_pallas.1} parent=5 // pred_check
        _
      $region10: #{dropout_pallas.1} parent=5 // pred_check_branch
        %102 = sbr.rel (%p99) target = $region12
      $region11: #{dropout_pallas.1} parent=5 // pred_region
        %s103 = ssub.s32 %s11, 1
      $region12: #{dropout_pallas.1} parent=5 // pred_fallthru
        _
      %p104 = scmp.lt.s32.totalorder %s11, 4
      // Predicated region
      $region13: #{dropout_pallas.1} parent=5 // pred_check
        %p105 = pneg %p104
      $region14: #{dropout_pallas.1} parent=5 // pred_check_branch
        %107 = sbr.rel (%p105) target = $region16
      $region15: #{dropout_pallas.1} parent=5 // pred_region
        // Predicated region
        $region17: #{dropout_pallas.1} parent=15 // pred_check
          %p108 = pneg %p31
        $region18: #{dropout_pallas.1} parent=15 // pred_check_branch
          %110 = sbr.rel (%p108) target = $region20
        $region19: #{dropout_pallas.1} parent=15 // pred_region
          %s111 = smul.u32 12, %s11
          %p112 = scmp.lt.s32.totalorder %s111, 47
          %s113 = scalar_select %p112, %s111, 47
          %s114 = smul.addr %s113, 6
          %s115 = smul.addr %s114, 8
          %s116 = scalar_lea.vmem %s0, %s115
          %s117 = smul.u32 12, %s11
        $region20: #{dropout_pallas.1} parent=15 // pred_fallthru
          _
        // Predicated region
        $region21: #{dropout_pallas.1} parent=15 // pred_check
          %p118 = pneg %p57
        $region22: #{dropout_pallas.1} parent=15 // pred_check_branch
          %120 = sbr.rel (%p118) target = $region24
        $region23: #{dropout_pallas.1} parent=15 // pred_region
          %s121 = smul.u32 12, %s11
          %p122 = scmp.lt.s32.totalorder %s121, 47
          %s123 = scalar_select %p122, %s121, 47
          %s124 = smul.addr %s123, 6
          %s125 = smul.addr %s124, 8
          %s126 = scalar_lea.vmem %s1, %s125
          %s127 = smul.u32 12, %s11
        $region24: #{dropout_pallas.1} parent=15 // pred_fallthru
          _
      $region16: #{dropout_pallas.1} parent=5 // pred_fallthru
        _
      %p128 = scmp.le.s32.totalorder 1, %s11
      %p129 = scmp.lt.s32.totalorder %s11, 5
      %p130 = pnand %p128, %p129
      %p131 = pneg %p130
      // Predicated region
      $region25: #{dropout_pallas.1} parent=5 // pred_check
        _
      $region26: #{dropout_pallas.1} parent=5 // pred_check_branch
        %133 = sbr.rel (%p130) target = $region28
      $region27: #{dropout_pallas.1} parent=5 // pred_region
        %s134 = ssub.s32 %s11, 1
        %s135 = smul.u32 12, %s16
        %p136 = scmp.lt.s32.totalorder %s135, 47
        %s137 = scalar_select %p136, %s135, 47
        %s138 = smul.addr %s137, 6
        %s139 = smul.addr %s138, 8
        %s140 = scalar_lea.vmem %s0, %s139
        %p141 = pneg %p37
        %p142 = pneg %p34
        %s143 = smul.u32 12, %s16
        %p144 = scmp.lt.s32.totalorder %s143, 47
        %s145 = scalar_select %p144, %s143, 47
        %s146 = smul.addr %s145, 6
        %s147 = smul.addr %s146, 8
        %s148 = scalar_lea.vmem %s1, %s147
        %p149 = pneg %p63
        %p150 = pneg %p60
        %p151 = pneg %p89
        %p152 = pneg %p86
        %s153 = sand.u32 %s76, 1
        %s154 = scalar_lea.sflag [#allocation3], %s153
        %s155 = sand.u32 %s76, 1
        %s156 = smul.addr %s155, 576
        %s157 = scalar_lea.vmem [#allocation2], %s156
        %s158 = smul.u32 12, %s16
        %p159 = scmp.lt.s32.totalorder %s158, 47
        %s160 = scalar_select %p159, %s158, 47
        %s161 = smul.addr %s160, 6
        %s162 = smul.addr %s161, 8
        %s163 = scalar_lea.vmem %s0, %s162
        %s164 = smul.u32 12, %s16
        %s165 = smul.u32 12, %s16
        %p166 = scmp.lt.s32.totalorder %s165, 47
        %s167 = scalar_select %p166, %s165, 47
        %s168 = smul.addr %s167, 6
        %s169 = smul.addr %s168, 8
        %s170 = scalar_lea.vmem %s1, %s169
        %s171 = smul.u32 12, %s16
        %s172 = smul.u32 12, %s16
        %v173 = vld [vmem:[%s170] sm:$0xff]
        %v174 = vld [vmem:[%s170 + $0x8] sm:$0xff]
        %v175 = vld [vmem:[%s170 + $0x10] sm:$0xff]
        %v176 = vld [vmem:[%s170 + $0x18] sm:$0xff]
        %v177 = vld [vmem:[%s170 + $0x20] sm:$0xff]
        %v178 = vld [vmem:[%s170 + $0x28] sm:$0xff]
        %v179 = vld [vmem:[%s170 + $0x30] sm:$0xff]
        %v180 = vld [vmem:[%s170 + $0x38] sm:$0xff]
        %v181 = vld [vmem:[%s170 + $0x40] sm:$0xff]
        %v182 = vld [vmem:[%s170 + $0x48] sm:$0xff]
        %v183 = vld [vmem:[%s170 + $0x50] sm:$0xff]
        %v184 = vld [vmem:[%s170 + $0x58] sm:$0xff]
        %v185 = vld [vmem:[%s170 + $0x60] sm:$0xff]
        %v186 = vld [vmem:[%s170 + $0x68] sm:$0xff]
        %v187 = vld [vmem:[%s170 + $0x70] sm:$0xff]
        %v188 = vld [vmem:[%s170 + $0x78] sm:$0xff]
        %v189 = vld [vmem:[%s170 + $0x80] sm:$0xff]
        %v190 = vld [vmem:[%s170 + $0x88] sm:$0xff]
        %v191 = vld [vmem:[%s170 + $0x90] sm:$0xff]
        %v192 = vld [vmem:[%s170 + $0x98] sm:$0xff]
        %v193 = vld [vmem:[%s170 + $0xa0] sm:$0xff]
        %v194 = vld [vmem:[%s170 + $0xa8] sm:$0xff]
        %v195 = vld [vmem:[%s170 + $0xb0] sm:$0xff]
        %v196 = vld [vmem:[%s170 + $0xb8] sm:$0xff]
        %v197 = vld [vmem:[%s170 + $0xc0] sm:$0xff]
        %v198 = vld [vmem:[%s170 + $0xc8] sm:$0xff]
        %v199 = vld [vmem:[%s170 + $0xd0] sm:$0xff]
        %v200 = vld [vmem:[%s170 + $0xd8] sm:$0xff]
        %v201 = vld [vmem:[%s170 + $0xe0] sm:$0xff]
        %v202 = vld [vmem:[%s170 + $0xe8] sm:$0xff]
        %v203 = vld [vmem:[%s170 + $0xf0] sm:$0xff]
        %v204 = vld [vmem:[%s170 + $0xf8] sm:$0xff]
        %v205 = vld [vmem:[%s170 + $0x100] sm:$0xff]
        %v206 = vld [vmem:[%s170 + $0x108] sm:$0xff]
        %v207 = vld [vmem:[%s170 + $0x110] sm:$0xff]
        %v208 = vld [vmem:[%s170 + $0x118] sm:$0xff]
        %v209 = vld [vmem:[%s170 + $0x120] sm:$0xff]
        %v210 = vld [vmem:[%s170 + $0x128] sm:$0xff]
        %v211 = vld [vmem:[%s170 + $0x130] sm:$0xff]
        %v212 = vld [vmem:[%s170 + $0x138] sm:$0xff]
        %v213 = vld [vmem:[%s170 + $0x140] sm:$0xff]
        %v214 = vld [vmem:[%s170 + $0x148] sm:$0xff]
        %v215 = vld [vmem:[%s170 + $0x150] sm:$0xff]
        %v216 = vld [vmem:[%s170 + $0x158] sm:$0xff]
        %v217 = vld [vmem:[%s170 + $0x160] sm:$0xff]
        %v218 = vld [vmem:[%s170 + $0x168] sm:$0xff]
        %v219 = vld [vmem:[%s170 + $0x170] sm:$0xff]
        %v220 = vld [vmem:[%s170 + $0x178] sm:$0xff]
        %v221 = vld [vmem:[%s170 + $0x180] sm:$0xff]
        %v222 = vld [vmem:[%s170 + $0x188] sm:$0xff]
        %v223 = vld [vmem:[%s170 + $0x190] sm:$0xff]
        %v224 = vld [vmem:[%s170 + $0x198] sm:$0xff]
        %v225 = vld [vmem:[%s170 + $0x1a0] sm:$0xff]
        %v226 = vld [vmem:[%s170 + $0x1a8] sm:$0xff]
        %v227 = vld [vmem:[%s170 + $0x1b0] sm:$0xff]
        %v228 = vld [vmem:[%s170 + $0x1b8] sm:$0xff]
        %v229 = vld [vmem:[%s170 + $0x1c0] sm:$0xff]
        %v230 = vld [vmem:[%s170 + $0x1c8] sm:$0xff]
        %v231 = vld [vmem:[%s170 + $0x1d0] sm:$0xff]
        %v232 = vld [vmem:[%s170 + $0x1d8] sm:$0xff]
        %v233 = vld [vmem:[%s170 + $0x1e0] sm:$0xff]
        %v234 = vld [vmem:[%s170 + $0x1e8] sm:$0xff]
        %v235 = vld [vmem:[%s170 + $0x1f0] sm:$0xff]
        %v236 = vld [vmem:[%s170 + $0x1f8] sm:$0xff]
        %v237 = vld [vmem:[%s170 + $0x200] sm:$0xff]
        %v238 = vld [vmem:[%s170 + $0x208] sm:$0xff]
        %v239 = vld [vmem:[%s170 + $0x210] sm:$0xff]
        %v240 = vld [vmem:[%s170 + $0x218] sm:$0xff]
        %v241 = vld [vmem:[%s170 + $0x220] sm:$0xff]
        %v242 = vld [vmem:[%s170 + $0x228] sm:$0xff]
        %v243 = vld [vmem:[%s170 + $0x230] sm:$0xff]
        %v244 = vld [vmem:[%s170 + $0x238] sm:$0xff]
        %vm245 = vcmp.ge.u32.totalorder %v173, 429496730
        %vm246 = vcmp.ge.u32.totalorder %v174, 429496730
        %vm247 = vcmp.ge.u32.totalorder %v175, 429496730
        %vm248 = vcmp.ge.u32.totalorder %v176, 429496730
        %vm249 = vcmp.ge.u32.totalorder %v177, 429496730
        %vm250 = vcmp.ge.u32.totalorder %v178, 429496730
        %vm251 = vcmp.ge.u32.totalorder %v179, 429496730
        %vm252 = vcmp.ge.u32.totalorder %v180, 429496730
        %vm253 = vcmp.ge.u32.totalorder %v181, 429496730
        %vm254 = vcmp.ge.u32.totalorder %v182, 429496730
        %vm255 = vcmp.ge.u32.totalorder %v183, 429496730
        %vm256 = vcmp.ge.u32.totalorder %v184, 429496730
        %vm257 = vcmp.ge.u32.totalorder %v185, 429496730
        %vm258 = vcmp.ge.u32.totalorder %v186, 429496730
        %vm259 = vcmp.ge.u32.totalorder %v187, 429496730
        %vm260 = vcmp.ge.u32.totalorder %v188, 429496730
        %vm261 = vcmp.ge.u32.totalorder %v189, 429496730
        %vm262 = vcmp.ge.u32.totalorder %v190, 429496730
        %vm263 = vcmp.ge.u32.totalorder %v191, 429496730
        %vm264 = vcmp.ge.u32.totalorder %v192, 429496730
        %vm265 = vcmp.ge.u32.totalorder %v193, 429496730
        %vm266 = vcmp.ge.u32.totalorder %v194, 429496730
        %vm267 = vcmp.ge.u32.totalorder %v195, 429496730
        %vm268 = vcmp.ge.u32.totalorder %v196, 429496730
        %vm269 = vcmp.ge.u32.totalorder %v197, 429496730
        %vm270 = vcmp.ge.u32.totalorder %v198, 429496730
        %vm271 = vcmp.ge.u32.totalorder %v199, 429496730
        %vm272 = vcmp.ge.u32.totalorder %v200, 429496730
        %vm273 = vcmp.ge.u32.totalorder %v201, 429496730
        %vm274 = vcmp.ge.u32.totalorder %v202, 429496730
        %vm275 = vcmp.ge.u32.totalorder %v203, 429496730
        %vm276 = vcmp.ge.u32.totalorder %v204, 429496730
        %vm277 = vcmp.ge.u32.totalorder %v205, 429496730
        %vm278 = vcmp.ge.u32.totalorder %v206, 429496730
        %vm279 = vcmp.ge.u32.totalorder %v207, 429496730
        %vm280 = vcmp.ge.u32.totalorder %v208, 429496730
        %vm281 = vcmp.ge.u32.totalorder %v209, 429496730
        %vm282 = vcmp.ge.u32.totalorder %v210, 429496730
        %vm283 = vcmp.ge.u32.totalorder %v211, 429496730
        %vm284 = vcmp.ge.u32.totalorder %v212, 429496730
        %vm285 = vcmp.ge.u32.totalorder %v213, 429496730
        %vm286 = vcmp.ge.u32.totalorder %v214, 429496730
        %vm287 = vcmp.ge.u32.totalorder %v215, 429496730
        %vm288 = vcmp.ge.u32.totalorder %v216, 429496730
        %vm289 = vcmp.ge.u32.totalorder %v217, 429496730
        %vm290 = vcmp.ge.u32.totalorder %v218, 429496730
        %vm291 = vcmp.ge.u32.totalorder %v219, 429496730
        %vm292 = vcmp.ge.u32.totalorder %v220, 429496730
        %vm293 = vcmp.ge.u32.totalorder %v221, 429496730
        %vm294 = vcmp.ge.u32.totalorder %v222, 429496730
        %vm295 = vcmp.ge.u32.totalorder %v223, 429496730
        %vm296 = vcmp.ge.u32.totalorder %v224, 429496730
        %vm297 = vcmp.ge.u32.totalorder %v225, 429496730
        %vm298 = vcmp.ge.u32.totalorder %v226, 429496730
        %vm299 = vcmp.ge.u32.totalorder %v227, 429496730
        %vm300 = vcmp.ge.u32.totalorder %v228, 429496730
        %vm301 = vcmp.ge.u32.totalorder %v229, 429496730
        %vm302 = vcmp.ge.u32.totalorder %v230, 429496730
        %vm303 = vcmp.ge.u32.totalorder %v231, 429496730
        %vm304 = vcmp.ge.u32.totalorder %v232, 429496730
        %vm305 = vcmp.ge.u32.totalorder %v233, 429496730
        %vm306 = vcmp.ge.u32.totalorder %v234, 429496730
        %vm307 = vcmp.ge.u32.totalorder %v235, 429496730
        %vm308 = vcmp.ge.u32.totalorder %v236, 429496730
        %vm309 = vcmp.ge.u32.totalorder %v237, 429496730
        %vm310 = vcmp.ge.u32.totalorder %v238, 429496730
        %vm311 = vcmp.ge.u32.totalorder %v239, 429496730
        %vm312 = vcmp.ge.u32.totalorder %v240, 429496730
        %vm313 = vcmp.ge.u32.totalorder %v241, 429496730
        %vm314 = vcmp.ge.u32.totalorder %v242, 429496730
        %vm315 = vcmp.ge.u32.totalorder %v243, 429496730
        %vm316 = vcmp.ge.u32.totalorder %v244, 429496730
        %v317 = vld [vmem:[%s163] sm:$0xff]
        %v318 = vld [vmem:[%s163 + $0x8] sm:$0xff]
        %v319 = vld [vmem:[%s163 + $0x10] sm:$0xff]
        %v320 = vld [vmem:[%s163 + $0x18] sm:$0xff]
        %v321 = vld [vmem:[%s163 + $0x20] sm:$0xff]
        %v322 = vld [vmem:[%s163 + $0x28] sm:$0xff]
        %v323 = vld [vmem:[%s163 + $0x30] sm:$0xff]
        %v324 = vld [vmem:[%s163 + $0x38] sm:$0xff]
        %v325 = vld [vmem:[%s163 + $0x40] sm:$0xff]
        %v326 = vld [vmem:[%s163 + $0x48] sm:$0xff]
        %v327 = vld [vmem:[%s163 + $0x50] sm:$0xff]
        %v328 = vld [vmem:[%s163 + $0x58] sm:$0xff]
        %v329 = vld [vmem:[%s163 + $0x60] sm:$0xff]
        %v330 = vld [vmem:[%s163 + $0x68] sm:$0xff]
        %v331 = vld [vmem:[%s163 + $0x70] sm:$0xff]
        %v332 = vld [vmem:[%s163 + $0x78] sm:$0xff]
        %v333 = vld [vmem:[%s163 + $0x80] sm:$0xff]
        %v334 = vld [vmem:[%s163 + $0x88] sm:$0xff]
        %v335 = vld [vmem:[%s163 + $0x90] sm:$0xff]
        %v336 = vld [vmem:[%s163 + $0x98] sm:$0xff]
        %v337 = vld [vmem:[%s163 + $0xa0] sm:$0xff]
        %v338 = vld [vmem:[%s163 + $0xa8] sm:$0xff]
        %v339 = vld [vmem:[%s163 + $0xb0] sm:$0xff]
        %v340 = vld [vmem:[%s163 + $0xb8] sm:$0xff]
        %v341 = vld [vmem:[%s163 + $0xc0] sm:$0xff]
        %v342 = vld [vmem:[%s163 + $0xc8] sm:$0xff]
        %v343 = vld [vmem:[%s163 + $0xd0] sm:$0xff]
        %v344 = vld [vmem:[%s163 + $0xd8] sm:$0xff]
        %v345 = vld [vmem:[%s163 + $0xe0] sm:$0xff]
        %v346 = vld [vmem:[%s163 + $0xe8] sm:$0xff]
        %v347 = vld [vmem:[%s163 + $0xf0] sm:$0xff]
        %v348 = vld [vmem:[%s163 + $0xf8] sm:$0xff]
        %v349 = vld [vmem:[%s163 + $0x100] sm:$0xff]
        %v350 = vld [vmem:[%s163 + $0x108] sm:$0xff]
        %v351 = vld [vmem:[%s163 + $0x110] sm:$0xff]
        %v352 = vld [vmem:[%s163 + $0x118] sm:$0xff]
        %v353 = vld [vmem:[%s163 + $0x120] sm:$0xff]
        %v354 = vld [vmem:[%s163 + $0x128] sm:$0xff]
        %v355 = vld [vmem:[%s163 + $0x130] sm:$0xff]
        %v356 = vld [vmem:[%s163 + $0x138] sm:$0xff]
        %v357 = vld [vmem:[%s163 + $0x140] sm:$0xff]
        %v358 = vld [vmem:[%s163 + $0x148] sm:$0xff]
        %v359 = vld [vmem:[%s163 + $0x150] sm:$0xff]
        %v360 = vld [vmem:[%s163 + $0x158] sm:$0xff]
        %v361 = vld [vmem:[%s163 + $0x160] sm:$0xff]
        %v362 = vld [vmem:[%s163 + $0x168] sm:$0xff]
        %v363 = vld [vmem:[%s163 + $0x170] sm:$0xff]
        %v364 = vld [vmem:[%s163 + $0x178] sm:$0xff]
        %v365 = vld [vmem:[%s163 + $0x180] sm:$0xff]
        %v366 = vld [vmem:[%s163 + $0x188] sm:$0xff]
        %v367 = vld [vmem:[%s163 + $0x190] sm:$0xff]
        %v368 = vld [vmem:[%s163 + $0x198] sm:$0xff]
        %v369 = vld [vmem:[%s163 + $0x1a0] sm:$0xff]
        %v370 = vld [vmem:[%s163 + $0x1a8] sm:$0xff]
        %v371 = vld [vmem:[%s163 + $0x1b0] sm:$0xff]
        %v372 = vld [vmem:[%s163 + $0x1b8] sm:$0xff]
        %v373 = vld [vmem:[%s163 + $0x1c0] sm:$0xff]
        %v374 = vld [vmem:[%s163 + $0x1c8] sm:$0xff]
        %v375 = vld [vmem:[%s163 + $0x1d0] sm:$0xff]
        %v376 = vld [vmem:[%s163 + $0x1d8] sm:$0xff]
        %v377 = vld [vmem:[%s163 + $0x1e0] sm:$0xff]
        %v378 = vld [vmem:[%s163 + $0x1e8] sm:$0xff]
        %v379 = vld [vmem:[%s163 + $0x1f0] sm:$0xff]
        %v380 = vld [vmem:[%s163 + $0x1f8] sm:$0xff]
        %v381 = vld [vmem:[%s163 + $0x200] sm:$0xff]
        %v382 = vld [vmem:[%s163 + $0x208] sm:$0xff]
        %v383 = vld [vmem:[%s163 + $0x210] sm:$0xff]
        %v384 = vld [vmem:[%s163 + $0x218] sm:$0xff]
        %v385 = vld [vmem:[%s163 + $0x220] sm:$0xff]
        %v386 = vld [vmem:[%s163 + $0x228] sm:$0xff]
        %v387 = vld [vmem:[%s163 + $0x230] sm:$0xff]
        %v388 = vld [vmem:[%s163 + $0x238] sm:$0xff]
        %v389 = vmul.f32 %v317, 1.1111112
        %v390 = vmul.f32 %v318, 1.1111112
        %v391 = vmul.f32 %v319, 1.1111112
        %v392 = vmul.f32 %v320, 1.1111112
        %v393 = vmul.f32 %v321, 1.1111112
        %v394 = vmul.f32 %v322, 1.1111112
        %v395 = vmul.f32 %v323, 1.1111112
        %v396 = vmul.f32 %v324, 1.1111112
        %v397 = vmul.f32 %v325, 1.1111112
        %v398 = vmul.f32 %v326, 1.1111112
        %v399 = vmul.f32 %v327, 1.1111112
        %v400 = vmul.f32 %v328, 1.1111112
        %v401 = vmul.f32 %v329, 1.1111112
        %v402 = vmul.f32 %v330, 1.1111112
        %v403 = vmul.f32 %v331, 1.1111112
        %v404 = vmul.f32 %v332, 1.1111112
        %v405 = vmul.f32 %v333, 1.1111112
        %v406 = vmul.f32 %v334, 1.1111112
        %v407 = vmul.f32 %v335, 1.1111112
        %v408 = vmul.f32 %v336, 1.1111112
        %v409 = vmul.f32 %v337, 1.1111112
        %v410 = vmul.f32 %v338, 1.1111112
        %v411 = vmul.f32 %v339, 1.1111112
        %v412 = vmul.f32 %v340, 1.1111112
        %v413 = vmul.f32 %v341, 1.1111112
        %v414 = vmul.f32 %v342, 1.1111112
        %v415 = vmul.f32 %v343, 1.1111112
        %v416 = vmul.f32 %v344, 1.1111112
        %v417 = vmul.f32 %v345, 1.1111112
        %v418 = vmul.f32 %v346, 1.1111112
        %v419 = vmul.f32 %v347, 1.1111112
        %v420 = vmul.f32 %v348, 1.1111112
        %v421 = vmul.f32 %v349, 1.1111112
        %v422 = vmul.f32 %v350, 1.1111112
        %v423 = vmul.f32 %v351, 1.1111112
        %v424 = vmul.f32 %v352, 1.1111112
        %v425 = vmul.f32 %v353, 1.1111112
        %v426 = vmul.f32 %v354, 1.1111112
        %v427 = vmul.f32 %v355, 1.1111112
        %v428 = vmul.f32 %v356, 1.1111112
        %v429 = vmul.f32 %v357, 1.1111112
        %v430 = vmul.f32 %v358, 1.1111112
        %v431 = vmul.f32 %v359, 1.1111112
        %v432 = vmul.f32 %v360, 1.1111112
        %v433 = vmul.f32 %v361, 1.1111112
        %v434 = vmul.f32 %v362, 1.1111112
        %v435 = vmul.f32 %v363, 1.1111112
        %v436 = vmul.f32 %v364, 1.1111112
        %v437 = vmul.f32 %v365, 1.1111112
        %v438 = vmul.f32 %v366, 1.1111112
        %v439 = vmul.f32 %v367, 1.1111112
        %v440 = vmul.f32 %v368, 1.1111112
        %v441 = vmul.f32 %v369, 1.1111112
        %v442 = vmul.f32 %v370, 1.1111112
        %v443 = vmul.f32 %v371, 1.1111112
        %v444 = vmul.f32 %v372, 1.1111112
        %v445 = vmul.f32 %v373, 1.1111112
        %v446 = vmul.f32 %v374, 1.1111112
        %v447 = vmul.f32 %v375, 1.1111112
        %v448 = vmul.f32 %v376, 1.1111112
        %v449 = vmul.f32 %v377, 1.1111112
        %v450 = vmul.f32 %v378, 1.1111112
        %v451 = vmul.f32 %v379, 1.1111112
        %v452 = vmul.f32 %v380, 1.1111112
        %v453 = vmul.f32 %v381, 1.1111112
        %v454 = vmul.f32 %v382, 1.1111112
        %v455 = vmul.f32 %v383, 1.1111112
        %v456 = vmul.f32 %v384, 1.1111112
        %v457 = vmul.f32 %v385, 1.1111112
        %v458 = vmul.f32 %v386, 1.1111112
        %v459 = vmul.f32 %v387, 1.1111112
        %v460 = vmul.f32 %v388, 1.1111112
        %v461 = vsel %vm245, %v389, 0.0
        %v462 = vsel %vm246, %v390, 0.0
        %v463 = vsel %vm247, %v391, 0.0
        %v464 = vsel %vm248, %v392, 0.0
        %v465 = vsel %vm249, %v393, 0.0
        %v466 = vsel %vm250, %v394, 0.0
        %v467 = vsel %vm251, %v395, 0.0
        %v468 = vsel %vm252, %v396, 0.0
        %v469 = vsel %vm253, %v397, 0.0
        %v470 = vsel %vm254, %v398, 0.0
        %v471 = vsel %vm255, %v399, 0.0
        %v472 = vsel %vm256, %v400, 0.0
        %v473 = vsel %vm257, %v401, 0.0
        %v474 = vsel %vm258, %v402, 0.0
        %v475 = vsel %vm259, %v403, 0.0
        %v476 = vsel %vm260, %v404, 0.0
        %v477 = vsel %vm261, %v405, 0.0
        %v478 = vsel %vm262, %v406, 0.0
        %v479 = vsel %vm263, %v407, 0.0
        %v480 = vsel %vm264, %v408, 0.0
        %v481 = vsel %vm265, %v409, 0.0
        %v482 = vsel %vm266, %v410, 0.0
        %v483 = vsel %vm267, %v411, 0.0
        %v484 = vsel %vm268, %v412, 0.0
        %v485 = vsel %vm269, %v413, 0.0
        %v486 = vsel %vm270, %v414, 0.0
        %v487 = vsel %vm271, %v415, 0.0
        %v488 = vsel %vm272, %v416, 0.0
        %v489 = vsel %vm273, %v417, 0.0
        %v490 = vsel %vm274, %v418, 0.0
        %v491 = vsel %vm275, %v419, 0.0
        %v492 = vsel %vm276, %v420, 0.0
        %v493 = vsel %vm277, %v421, 0.0
        %v494 = vsel %vm278, %v422, 0.0
        %v495 = vsel %vm279, %v423, 0.0
        %v496 = vsel %vm280, %v424, 0.0
        %v497 = vsel %vm281, %v425, 0.0
        %v498 = vsel %vm282, %v426, 0.0
        %v499 = vsel %vm283, %v427, 0.0
        %v500 = vsel %vm284, %v428, 0.0
        %v501 = vsel %vm285, %v429, 0.0
        %v502 = vsel %vm286, %v430, 0.0
        %v503 = vsel %vm287, %v431, 0.0
        %v504 = vsel %vm288, %v432, 0.0
        %v505 = vsel %vm289, %v433, 0.0
        %v506 = vsel %vm290, %v434, 0.0
        %v507 = vsel %vm291, %v435, 0.0
        %v508 = vsel %vm292, %v436, 0.0
        %v509 = vsel %vm293, %v437, 0.0
        %v510 = vsel %vm294, %v438, 0.0
        %v511 = vsel %vm295, %v439, 0.0
        %v512 = vsel %vm296, %v440, 0.0
        %v513 = vsel %vm297, %v441, 0.0
        %v514 = vsel %vm298, %v442, 0.0
        %v515 = vsel %vm299, %v443, 0.0
        %v516 = vsel %vm300, %v444, 0.0
        %v517 = vsel %vm301, %v445, 0.0
        %v518 = vsel %vm302, %v446, 0.0
        %v519 = vsel %vm303, %v447, 0.0
        %v520 = vsel %vm304, %v448, 0.0
        %v521 = vsel %vm305, %v449, 0.0
        %v522 = vsel %vm306, %v450, 0.0
        %v523 = vsel %vm307, %v451, 0.0
        %v524 = vsel %vm308, %v452, 0.0
        %v525 = vsel %vm309, %v453, 0.0
        %v526 = vsel %vm310, %v454, 0.0
        %v527 = vsel %vm311, %v455, 0.0
        %v528 = vsel %vm312, %v456, 0.0
        %v529 = vsel %vm313, %v457, 0.0
        %v530 = vsel %vm314, %v458, 0.0
        %v531 = vsel %vm315, %v459, 0.0
        %v532 = vsel %vm316, %v460, 0.0
        %533 = vst [vmem:[%s157] sm:$0xff] %v461
        %534 = vst [vmem:[%s157 + $0x8] sm:$0xff] %v462
        %535 = vst [vmem:[%s157 + $0x10] sm:$0xff] %v463
        %536 = vst [vmem:[%s157 + $0x18] sm:$0xff] %v464
        %537 = vst [vmem:[%s157 + $0x20] sm:$0xff] %v465
        %538 = vst [vmem:[%s157 + $0x28] sm:$0xff] %v466
        %539 = vst [vmem:[%s157 + $0x30] sm:$0xff] %v467
        %540 = vst [vmem:[%s157 + $0x38] sm:$0xff] %v468
        %541 = vst [vmem:[%s157 + $0x40] sm:$0xff] %v469
        %542 = vst [vmem:[%s157 + $0x48] sm:$0xff] %v470
        %543 = vst [vmem:[%s157 + $0x50] sm:$0xff] %v471
        %544 = vst [vmem:[%s157 + $0x58] sm:$0xff] %v472
        %545 = vst [vmem:[%s157 + $0x60] sm:$0xff] %v473
        %546 = vst [vmem:[%s157 + $0x68] sm:$0xff] %v474
        %547 = vst [vmem:[%s157 + $0x70] sm:$0xff] %v475
        %548 = vst [vmem:[%s157 + $0x78] sm:$0xff] %v476
        %549 = vst [vmem:[%s157 + $0x80] sm:$0xff] %v477
        %550 = vst [vmem:[%s157 + $0x88] sm:$0xff] %v478
        %551 = vst [vmem:[%s157 + $0x90] sm:$0xff] %v479
        %552 = vst [vmem:[%s157 + $0x98] sm:$0xff] %v480
        %553 = vst [vmem:[%s157 + $0xa0] sm:$0xff] %v481
        %554 = vst [vmem:[%s157 + $0xa8] sm:$0xff] %v482
        %555 = vst [vmem:[%s157 + $0xb0] sm:$0xff] %v483
        %556 = vst [vmem:[%s157 + $0xb8] sm:$0xff] %v484
        %557 = vst [vmem:[%s157 + $0xc0] sm:$0xff] %v485
        %558 = vst [vmem:[%s157 + $0xc8] sm:$0xff] %v486
        %559 = vst [vmem:[%s157 + $0xd0] sm:$0xff] %v487
        %560 = vst [vmem:[%s157 + $0xd8] sm:$0xff] %v488
        %561 = vst [vmem:[%s157 + $0xe0] sm:$0xff] %v489
        %562 = vst [vmem:[%s157 + $0xe8] sm:$0xff] %v490
        %563 = vst [vmem:[%s157 + $0xf0] sm:$0xff] %v491
        %564 = vst [vmem:[%s157 + $0xf8] sm:$0xff] %v492
        %565 = vst [vmem:[%s157 + $0x100] sm:$0xff] %v493
        %566 = vst [vmem:[%s157 + $0x108] sm:$0xff] %v494
        %567 = vst [vmem:[%s157 + $0x110] sm:$0xff] %v495
        %568 = vst [vmem:[%s157 + $0x118] sm:$0xff] %v496
        %569 = vst [vmem:[%s157 + $0x120] sm:$0xff] %v497
        %570 = vst [vmem:[%s157 + $0x128] sm:$0xff] %v498
        %571 = vst [vmem:[%s157 + $0x130] sm:$0xff] %v499
        %572 = vst [vmem:[%s157 + $0x138] sm:$0xff] %v500
        %573 = vst [vmem:[%s157 + $0x140] sm:$0xff] %v501
        %574 = vst [vmem:[%s157 + $0x148] sm:$0xff] %v502
        %575 = vst [vmem:[%s157 + $0x150] sm:$0xff] %v503
        %576 = vst [vmem:[%s157 + $0x158] sm:$0xff] %v504
        %577 = vst [vmem:[%s157 + $0x160] sm:$0xff] %v505
        %578 = vst [vmem:[%s157 + $0x168] sm:$0xff] %v506
        %579 = vst [vmem:[%s157 + $0x170] sm:$0xff] %v507
        %580 = vst [vmem:[%s157 + $0x178] sm:$0xff] %v508
        %581 = vst [vmem:[%s157 + $0x180] sm:$0xff] %v509
        %582 = vst [vmem:[%s157 + $0x188] sm:$0xff] %v510
        %583 = vst [vmem:[%s157 + $0x190] sm:$0xff] %v511
        %584 = vst [vmem:[%s157 + $0x198] sm:$0xff] %v512
        %585 = vst [vmem:[%s157 + $0x1a0] sm:$0xff] %v513
        %586 = vst [vmem:[%s157 + $0x1a8] sm:$0xff] %v514
        %587 = vst [vmem:[%s157 + $0x1b0] sm:$0xff] %v515
        %588 = vst [vmem:[%s157 + $0x1b8] sm:$0xff] %v516
        %589 = vst [vmem:[%s157 + $0x1c0] sm:$0xff] %v517
        %590 = vst [vmem:[%s157 + $0x1c8] sm:$0xff] %v518
        %591 = vst [vmem:[%s157 + $0x1d0] sm:$0xff] %v519
        %592 = vst [vmem:[%s157 + $0x1d8] sm:$0xff] %v520
        %593 = vst [vmem:[%s157 + $0x1e0] sm:$0xff] %v521
        %594 = vst [vmem:[%s157 + $0x1e8] sm:$0xff] %v522
        %595 = vst [vmem:[%s157 + $0x1f0] sm:$0xff] %v523
        %596 = vst [vmem:[%s157 + $0x1f8] sm:$0xff] %v524
        %597 = vst [vmem:[%s157 + $0x200] sm:$0xff] %v525
        %598 = vst [vmem:[%s157 + $0x208] sm:$0xff] %v526
        %599 = vst [vmem:[%s157 + $0x210] sm:$0xff] %v527
        %600 = vst [vmem:[%s157 + $0x218] sm:$0xff] %v528
        %601 = vst [vmem:[%s157 + $0x220] sm:$0xff] %v529
        %602 = vst [vmem:[%s157 + $0x228] sm:$0xff] %v530
        %603 = vst [vmem:[%s157 + $0x230] sm:$0xff] %v531
        %604 = vst [vmem:[%s157 + $0x238] sm:$0xff] %v532
        %s605 = sand.u32 %s76, 1
        %s606 = scalar_lea.sflag [#allocation3], %s605
        %s607 = sand.u32 %s76, 1
        %s608 = smul.addr %s607, 576
        %s609 = scalar_lea.vmem [#allocation2], %s608
        // Predicated region
        $region29: #{dropout_pallas.1} parent=27 // pred_check
          %p610 = pneg %p86
        $region30: #{dropout_pallas.1} parent=27 // pred_check_branch
          %612 = sbr.rel (%p610) target = $region32
        $region31: #{dropout_pallas.1} parent=27 // pred_region
          %s613 = smul.u32 12, %s16
          %s615 = ssub.s32 9216, 9216
          %616 = vsyncadd %s606, %s615
          %s617 = smul.addr %s613, 6
          %s618 = smul.addr %s617, 128
          %s619 = scalar_lea.hbm %s2, %s618
          %s620 = sshll.u32 %s609, 4
          %s621 = int_to_ptr.vmem [resolvable:$true] %s620
          %626 = dma.vmem_to_hbm [thread:$0]  %s621, 9216, %s619, %s606, 768, 768, 48
        $region32: #{dropout_pallas.1} parent=27 // pred_fallthru
          _
      $region28: #{dropout_pallas.1} parent=5 // pred_fallthru
        _
      %p627 = scmp.le.s32.totalorder 2, %s11
      // Predicated region
      $region33: #{dropout_pallas.1} parent=5 // pred_check
        %p628 = pneg %p627
      $region34: #{dropout_pallas.1} parent=5 // pred_check_branch
        %630 = sbr.rel (%p628) target = $region36
      $region35: #{dropout_pallas.1} parent=5 // pred_region
        %s631 = ssub.s32 %s11, 2
        // Predicated region
        $region37: #{dropout_pallas.1} parent=35 // pred_check
          %p632 = pneg %p92
        $region38: #{dropout_pallas.1} parent=35 // pred_check_branch
          %634 = sbr.rel (%p632) target = $region40
        $region39: #{dropout_pallas.1} parent=35 // pred_region
          %s635 = sand.u32 %s77, 1
          %s636 = scalar_lea.sflag [#allocation3], %s635
          %s637 = sand.u32 %s77, 1
          %s638 = smul.addr %s637, 576
          %s639 = scalar_lea.vmem [#allocation2], %s638
          %640 = dma.done %s636, 9216
        $region40: #{dropout_pallas.1} parent=35 // pred_fallthru
          _
      $region36: #{dropout_pallas.1} parent=5 // pred_fallthru
        _
    $region6: #{dropout_pallas.1} parent=1 // loop_footer
      %s15 = sadd.s32 1, %s11
    $region7: #{dropout_pallas.1} parent=1 // loop_footer_branch
      %10 = sbr.rel target = $region3
    $region8: #{dropout_pallas.1} parent=1 // loop_exit
      _
    %641 = vsyncpa [#allocation3], 1
    %s642 = scalar_lea.sflag [#allocation3], 1
    %643 = vsyncpa %s642, 1

</llo_original>
